<compile_context>
chip_gen: v7x
topology: tpu7x:2x2x1
jax: 0.10.0
libtpu: 0.0.40
codegen_flags: <defaults>
</compile_context>

<pallas_src>
import functools

import jax
import jax.numpy as jnp
from jax import lax
from jax.experimental import pallas as pl
from jax.experimental.pallas import tpu as pltpu


# ---------------------------------------------------------------------------
# Kernel 1: tcn_proj  — fused Linear + Tanh (+ identity dropout) + permute.
#   in : x (N, L, F)   (PyTorch batch, seq, features)
#   out: h (N, F, L)   (NCL layout consumed by the TCN convs)
# ---------------------------------------------------------------------------
def _proj_tanh_kernel(x_ref, w_ref, b_ref, o_ref):
    x = x_ref[0]          # (L, F)
    w = w_ref[...]        # (F, F), PyTorch layout [out, in]
    b = b_ref[...]        # (F, 1)
    # out[f, l] = sum_k w[f, k] * x[l, k]  -> produced directly in NCL layout.
    y = lax.dot_general(w, x, (((1,), (1,)), ((), ())),
                        preferred_element_type=jnp.float32)
    o_ref[0] = jnp.tanh(y + b).astype(o_ref.dtype)
    # TODO(synk): dropout is identity here (inference); training-mode masking
    # would use pltpu.prng_seed / pltpu.prng_random_bits.


def proj_tanh(x, w, b):
    n, l, f = x.shape
    return pl.pallas_call(
        _proj_tanh_kernel,
        out_shape=jax.ShapeDtypeStruct((n, f, l), x.dtype),
        grid_spec=pltpu.PrefetchScalarGridSpec(
            num_scalar_prefetch=0,
            grid=(n,),
            in_specs=[
                pl.BlockSpec((1, l, f), lambda i: (i, 0, 0)),
                pl.BlockSpec((f, f), lambda i: (0, 0)),
                pl.BlockSpec((f, 1), lambda i: (0, 0)),
            ],
            out_specs=pl.BlockSpec((1, f, l), lambda i: (i, 0, 0)),
        ),
        compiler_params=pltpu.CompilerParams(
            dimension_semantics=("parallel",)),
    )(x, w, b)


# ---------------------------------------------------------------------------
# Kernel 2: fused TemporalBlock (2 causal dilated convs + ReLUs + residual).
# ---------------------------------------------------------------------------
def _causal_dilated_conv(x, w_ref, b, k, dilation, c_out, l):
    """Causal dilated conv: chomp folded in (only L outputs computed).

    x:      (C_in, L) f32 value
    w_ref:  Ref (K, C_out, C_in)
    b:      (C_out, 1) f32 value
    """
    p = (k - 1) * dilation
    c_in = x.shape[0]
    if p > 0:
        xpad = jnp.concatenate(
            [jnp.zeros((c_in, p), jnp.float32), x], axis=1)  # (C_in, L + P)
    else:
        xpad = x
    acc = jnp.zeros((c_out, l), jnp.float32)
    for j in range(k):  # accumulate per-tap MXU matmuls over shifted views
        acc = acc + jnp.dot(
            w_ref[j], xpad[:, j * dilation:j * dilation + l],
            preferred_element_type=jnp.float32)
    return acc + b


def _temporal_block_kernel(x_ref, w1_ref, b1_ref, w2_ref, b2_ref, *rest,
                           k, dilation, has_downsample):
    if has_downsample:
        wd_ref, bd_ref, o_ref = rest
    else:
        (o_ref,) = rest

    c_out, l = o_ref.shape[1], o_ref.shape[2]
    x = x_ref[0].astype(jnp.float32)                       # (C_in, L)

    # conv1 + chomp + ReLU   (dropout = identity at inference)
    h = jnp.maximum(
        _causal_dilated_conv(x, w1_ref, b1_ref[...], k, dilation, c_out, l),
        0.0)
    # conv2 + chomp + ReLU   (dropout = identity at inference)
    out = jnp.maximum(
        _causal_dilated_conv(h, w2_ref, b2_ref[...], k, dilation, c_out, l),
        0.0)

    # residual branch (1x1 conv "downsample" iff C_in != C_out) + final ReLU
    if has_downsample:
        res = jnp.dot(wd_ref[...], x,
                      preferred_element_type=jnp.float32) + bd_ref[...]
    else:
        res = x
    o_ref[0] = jnp.maximum(out + res, 0.0).astype(o_ref.dtype)


def temporal_block(x, w1, b1, w2, b2, wd, bd, *, kernel_size, dilation):
    """x: (N, C_in, L); w1/w2: (K, C_out, C_in/C_out); b*: (C_out, 1)."""
    n, c_in, l = x.shape
    assert w1.shape[0] == kernel_size
    c_out = w1.shape[1]
    has_downsample = wd is not None

    kern = functools.partial(_temporal_block_kernel, k=kernel_size,
                             dilation=dilation, has_downsample=has_downsample)

    in_specs = [
        pl.BlockSpec((1, c_in, l), lambda i: (i, 0, 0)),
        pl.BlockSpec((kernel_size, c_out, c_in), lambda i: (0, 0, 0)),
        pl.BlockSpec((c_out, 1), lambda i: (0, 0)),
        pl.BlockSpec((kernel_size, c_out, c_out), lambda i: (0, 0, 0)),
        pl.BlockSpec((c_out, 1), lambda i: (0, 0)),
    ]
    args = [x, w1, b1, w2, b2]
    if has_downsample:
        in_specs += [
            pl.BlockSpec((c_out, c_in), lambda i: (0, 0)),
            pl.BlockSpec((c_out, 1), lambda i: (0, 0)),
        ]
        args += [wd, bd]

    return pl.pallas_call(
        kern,
        out_shape=jax.ShapeDtypeStruct((n, c_out, l), x.dtype),
        grid_spec=pltpu.PrefetchScalarGridSpec(
            num_scalar_prefetch=0,
            grid=(n,),
            in_specs=in_specs,
            out_specs=pl.BlockSpec((1, c_out, l), lambda i: (i, 0, 0)),
        ),
        compiler_params=pltpu.CompilerParams(
            dimension_semantics=("parallel",)),
    )(*args)


# ---------------------------------------------------------------------------
# Kernel 3: output head — Linear on the last time-step features.
# ---------------------------------------------------------------------------
def _head_kernel(x_ref, w_ref, b_ref, o_ref):
    y = lax.dot_general(x_ref[...], w_ref[...], (((1,), (1,)), ((), ())),
                        preferred_element_type=jnp.float32)
    o_ref[...] = (y + b_ref[...]).astype(o_ref.dtype)


def head_linear(x_last, w, b):
    n, c = x_last.shape
    o = w.shape[0]
    return pl.pallas_call(
        _head_kernel,
        out_shape=jax.ShapeDtypeStruct((n, o), x_last.dtype),
        grid_spec=pltpu.PrefetchScalarGridSpec(
            num_scalar_prefetch=0,
            grid=(1,),
            in_specs=[pl.BlockSpec((n, c), lambda i: (0, 0)),
                      pl.BlockSpec((o, c), lambda i: (0, 0)),
                      pl.BlockSpec((1, o), lambda i: (0, 0))],
            out_specs=pl.BlockSpec((n, o), lambda i: (0, 0)),
        ),
    )(x_last, w, b)


# ---------------------------------------------------------------------------
# Full TCNModel forward (inference).
# ---------------------------------------------------------------------------
def tcn_model_forward(x, params, *, kernel_size):
    # x = dropout(tanh(proj(x)))  fused with the (0,2,1) permute -> (N, F, L)
    h = proj_tanh(x, params["proj_w"], params["proj_b"])
    # TemporalConvNet: one fused kernel per TemporalBlock.
    for i, lvl in enumerate(params["levels"]):
        h = temporal_block(h, lvl["w1"], lvl["b1"], lvl["w2"], lvl["b2"],
                           lvl.get("wd"), lvl.get("bd"),
                           kernel_size=kernel_size, dilation=2 ** i)
    last = h[:, :, -1]          # tiny last-time-step gather (wrapper plumbing)
    return head_linear(last, params["lin_w"], params["lin_b"])


# ---------------------------------------------------------------------------
# Parameter construction (weight_norm folded into effective weights).
# ---------------------------------------------------------------------------
def fold_weight_norm(v, g):
    # PyTorch weight_norm(dim=0): per-output-channel norm over (in, k).
    norm = jnp.sqrt(jnp.sum(v * v, axis=(1, 2), keepdims=True))
    return g[:, None, None] * v / norm


def init_params(key, num_input, output_size, num_channels, kernel_size):
    keys = iter(jax.random.split(key, 64))
    nrm = lambda shape, s=1.0: s * jax.random.normal(next(keys), shape,
                                                     jnp.float32)
    f = num_input
    params = {
        "proj_w": nrm((f, f), 1.0 / float(f) ** 0.5),
        "proj_b": nrm((f, 1), 0.1),
        "levels": [],
    }
    c_prev = f
    for c_out in num_channels:
        v1 = nrm((c_out, c_prev, kernel_size), 0.01)
        g1 = 0.5 + jnp.abs(nrm((c_out,)))
        v2 = nrm((c_out, c_out, kernel_size), 0.01)
        g2 = 0.5 + jnp.abs(nrm((c_out,)))
        lvl = {
            # (C_out, C_in, K) -> (K, C_out, C_in) so w[j] is an MXU tile.
            "w1": jnp.transpose(fold_weight_norm(v1, g1), (2, 0, 1)),
            "b1": nrm((c_out, 1), 0.1),
            "w2": jnp.transpose(fold_weight_norm(v2, g2), (2, 0, 1)),
            "b2": nrm((c_out, 1), 0.1),
        }
        if c_prev != c_out:
            lvl["wd"] = nrm((c_out, c_prev), 0.01)
            lvl["bd"] = nrm((c_out, 1), 0.1)
        params["levels"].append(lvl)
        c_prev = c_out
    params["lin_w"] = nrm((output_size, c_prev), 1.0 / float(c_prev) ** 0.5)
    params["lin_b"] = nrm((1, output_size), 0.1)
    return params


# ---------------------------------------------------------------------------
# Pure-JAX reference (mirrors the PyTorch forward, inference mode).
# ---------------------------------------------------------------------------
def _ref_causal_conv(x, w, b, dilation):
    # x: (N, C_in, L), w: (C_out, C_in, K), b: (C_out,)
    p = (w.shape[-1] - 1) * dilation
    y = lax.conv_general_dilated(
        x, w, window_strides=(1,), padding=[(p, 0)], rhs_dilation=(dilation,),
        dimension_numbers=("NCH", "OIH", "NCH"),
        precision=lax.Precision.HIGHEST)
    return y + b[None, :, None]


def ref_forward(x, params, *, kernel_size):
    hp = lax.Precision.HIGHEST
    h = jnp.tanh(jnp.einsum("nlk,fk->nlf", x, params["proj_w"], precision=hp)
                 + params["proj_b"][:, 0])
    h = jnp.transpose(h, (0, 2, 1))
    for i, lvl in enumerate(params["levels"]):
        d = 2 ** i
        w1 = jnp.transpose(lvl["w1"], (1, 2, 0))
        w2 = jnp.transpose(lvl["w2"], (1, 2, 0))
        out = jax.nn.relu(_ref_causal_conv(h, w1, lvl["b1"][:, 0], d))
        out = jax.nn.relu(_ref_causal_conv(out, w2, lvl["b2"][:, 0], d))
        if lvl.get("wd") is not None:
            res = (jnp.einsum("oc,ncl->nol", lvl["wd"], h, precision=hp)
                   + lvl["bd"][:, 0][None, :, None])
        else:
            res = h
        h = jax.nn.relu(out + res)
    last = h[:, :, -1]
    return (jnp.einsum("nc,oc->no", last, params["lin_w"], precision=hp)
            + params["lin_b"][0])


if __name__ == "__main__":
    # Small shapes consistent with TCNModel.forward: x is (batch, seq, features).
    N, L = 2, 16
    num_input = 4
    num_channels = [8, 8]      # level 0 uses downsample (4->8), level 1 identity
    kernel_size = 3
    output_size = 3

    kx, kp = jax.random.split(jax.random.PRNGKey(0))
    x = jax.random.normal(kx, (N, L, num_input), dtype=jnp.float32)
    params = init_params(kp, num_input, output_size, num_channels, kernel_size)

    out = tcn_model_forward(x, params, kernel_size=kernel_size)
    out = jax.block_until_ready(out)

    ref = ref_forward(x, params, kernel_size=kernel_size)
    assert out.shape == (N, output_size), out.shape
    assert out.dtype == jnp.float32
    assert jnp.allclose(out, ref, rtol=1e-2, atol=1e-2), (out, ref)

    print("KERNEL_OK")
</pallas_src>

<mosaic_0001>
module attributes {stable_mosaic.version = 11 : i64} {
  func.func @_proj_tanh_kernel(%arg0: i32, %arg1: memref<1x16x4xf32, #tpu.memory_space<vmem>>, %arg2: memref<4x4xf32, #tpu.memory_space<vmem>>, %arg3: memref<4x1xf32, #tpu.memory_space<vmem>>, %arg4: memref<1x4x16xf32, #tpu.memory_space<vmem>>) attributes {dimension_semantics = [#tpu.dimension_semantics<parallel>], iteration_bounds = array<i64: 2>, scalar_prefetch = 0 : i64, scratch_operands = 0 : i64, tpu.core_type = #tpu.core_type<tc>, window_params = [{transform_indices = @transform_0, window_bounds = array<i64: 1, 16, 4>}, {pipeline_mode = #tpu.pipeline_mode<synchronous>, transform_indices = @transform_1, window_bounds = array<i64: 4, 4>}, {pipeline_mode = #tpu.pipeline_mode<synchronous>, transform_indices = @transform_2, window_bounds = array<i64: 4, 1>}, {transform_indices = @transform_3, window_bounds = array<i64: 1, 4, 16>}]} {
    %c0 = arith.constant 0 : index
    %c0_0 = arith.constant 0 : index
    %c0_1 = arith.constant 0 : index
    %0 = vector.load %arg1[%c0, %c0_0, %c0_1] : memref<1x16x4xf32, #tpu.memory_space<vmem>>, vector<1x16x4xf32>
    %1 = vector.shape_cast %0 : vector<1x16x4xf32> to vector<16x4xf32>
    %c0_2 = arith.constant 0 : index
    %c0_3 = arith.constant 0 : index
    %2 = vector.load %arg2[%c0_2, %c0_3] : memref<4x4xf32, #tpu.memory_space<vmem>>, vector<4x4xf32>
    %c0_4 = arith.constant 0 : index
    %c0_5 = arith.constant 0 : index
    %3 = vector.load %arg3[%c0_4, %c0_5] : memref<4x1xf32, #tpu.memory_space<vmem>>, vector<4x1xf32>
    %cst = arith.constant dense<0.000000e+00> : vector<4x16xf32>
    %4 = tpu.matmul %2, %1, %cst {dimension_numbers = #tpu.dot_dimension_numbers<[1], [1], [0], [0], [0, 0, 1, 0], [], []>} : vector<4x4xf32>, vector<16x4xf32>, vector<4x16xf32> -> vector<4x16xf32>
    %5 = vector.broadcast %3 : vector<4x1xf32> to vector<4x16xf32>
    %6 = arith.addf %4, %5 : vector<4x16xf32>
    %7 = math.tanh %6 : vector<4x16xf32>
    %c0_6 = arith.constant 0 : index
    %c0_7 = arith.constant 0 : index
    %c0_8 = arith.constant 0 : index
    %8 = vector.load %arg4[%c0_6, %c0_7, %c0_8] : memref<1x4x16xf32, #tpu.memory_space<vmem>>, vector<1x4x16xf32>
    %9 = vector.shape_cast %8 : vector<1x4x16xf32> to vector<4x16xf32>
    %10 = vector.shape_cast %7 : vector<4x16xf32> to vector<1x4x16xf32>
    tpu.vector_store %arg4[%c0_6, %c0_7, %c0_8], %10 {strides = array<i32>} : memref<1x4x16xf32, #tpu.memory_space<vmem>>, vector<1x4x16xf32>,
    return
  }
  func.func @transform_0(%arg0: i32) -> (i32, i32, i32) {
    %c0_i32 = arith.constant 0 : i32
    %c0_i32_0 = arith.constant 0 : i32
    %c0_i32_1 = arith.constant 0 : i32
    return %arg0, %c0_i32, %c0_i32_0 : i32, i32, i32
  }
  func.func @transform_1(%arg0: i32) -> (i32, i32) {
    %c0_i32 = arith.constant 0 : i32
    %c0_i32_0 = arith.constant 0 : i32
    %c0_i32_1 = arith.constant 0 : i32
    return %c0_i32, %c0_i32_0 : i32, i32
  }
  func.func @transform_2(%arg0: i32) -> (i32, i32) {
    %c0_i32 = arith.constant 0 : i32
    %c0_i32_0 = arith.constant 0 : i32
    %c0_i32_1 = arith.constant 0 : i32
    return %c0_i32, %c0_i32_0 : i32, i32
  }
  func.func @transform_3(%arg0: i32) -> (i32, i32, i32) {
    %c0_i32 = arith.constant 0 : i32
    %c0_i32_0 = arith.constant 0 : i32
    %c0_i32_1 = arith.constant 0 : i32
    return %arg0, %c0_i32, %c0_i32_0 : i32, i32, i32
  }
}

</mosaic_0001>

<llo_original>
// kernel: tpu_custom_call.1
$region0: #{tpu_custom_call.1}
  #allocation0 [shape = 'u32[]', space=smem, size = 0x4, offset = 0x4, fixed_abs, tag = 'smem constant byte address 0x4 - core index']
  #allocation1 [shape = 'u32[144,128]{1,0:T(1,128)}', space=vmem, size = 0x12000, scoped, tag = 'internal scratch']
  %s0 = inlined_call_operand.vmem [shape: f32[2,16,4], index: 0, kind: input, shape index: {}]
  %s1 = inlined_call_operand.vmem [shape: f32[4,4], index: 1, kind: input, shape index: {}]
  %s2 = inlined_call_operand.vmem [shape: f32[4,1], index: 2, kind: input, shape index: {}]
  %s3 = inlined_call_operand.hbm [shape: f32[2,4,16], index: 3, kind: output, shape index: {}]
  %s4 = sld [smem:[#allocation0]]
  $region45: #{tpu_custom_call.1} parent=0
    _
  %s6 = ssub.s32 1, %s4
  %s7 = scalar_select 0, %s6, %s4
  $region1: #{tpu_custom_call.1} parent=0
    #allocation2 [shape = 'u8[4096]{0}', space=vmem, size = 0x1000, scoped, tag = 'output window, operand 0']
    #allocation3 [shape = 's32[2]{0}', space=sflag, size = 0x8, scoped, tag = 'scoped memory for tpu_custom_call.1']
    %8 = vsyncpa [#allocation3], 0
    %s9 = scalar_lea.sflag [#allocation3], 1
    %10 = vsyncpa %s9, 0
    loop: start=0, step=1, limit=4
    $region2: #{tpu_custom_call.1} parent=1 // loop_pre_header
      _
    $region3: #{tpu_custom_call.1} parent=1 // loop_header
      %s12 = sphi 0, %s16
      %p13 = scmp.ge.s32.totalorder %s12, 4
      %s22 = sphi 0, %s24
      %s25 = sphi 0, %s22
      %s26 = sphi 0, %s25
      %s42 = sphi 0, %s26
      %s46 = sphi 0, %s46
      %s48 = sphi 0, %s46
      %s49 = sphi 0, %s48
      %s63 = sphi 0, %s49
      %s67 = sphi 0, %s67
      %s69 = sphi 0, %s67
      %s70 = sphi 0, %s69
      %s84 = sphi 0, %s70
      %s90 = sphi 0, %s92
      %s93 = sphi 0, %s90
      %s94 = sphi 0, %s93
      %s110 = sphi 0, %s94
    $region4: #{tpu_custom_call.1} parent=1 // loop_header_branch
      %15 = sbr.rel (%p13) target = $region8
    $region5: #{tpu_custom_call.1} parent=1 // loop_body
      %s17 = ssub.s32 %s12, 1
      %s18 = ssub.s32 %s12, 2
      %s19 = sadd.s32 %s12, 1
      %s20 = ssub.s32 %s12, %s19
      %p21 = scmp.eq.s32.totalorder %s20, 0
      %s23 = sadd.s32 %s22, 1
      %s24 = scalar_select %p21, %s22, %s23
      %p27 = pneg %p21
      %p28 = scmp.eq.s32.totalorder %s12, 1
      %p29 = por %p27, %p28
      %p30 = scmp.ne.s32.totalorder %s22, %s25
      %p31 = scmp.eq.s32.totalorder %s12, 0
      %p32 = por %p30, %p31
      %p33 = scmp.ne.s32.totalorder %s22, %s25
      %p34 = scmp.eq.s32.totalorder %s17, 1
      %p35 = por %p33, %p34
      %p36 = scmp.ne.s32.totalorder %s25, %s26
      %p37 = scmp.eq.s32.totalorder %s17, 0
      %p38 = por %p36, %p37
      %p39 = scmp.ne.s32.totalorder %s25, %s26
      %p40 = scmp.eq.s32.totalorder %s18, 1
      %p41 = por %p39, %p40
      %p43 = scmp.ne.s32.totalorder %s26, %s42
      %p44 = scmp.eq.s32.totalorder %s18, 0
      %p45 = por %p43, %p44
      %s47 = sadd.s32 %s46, 1
      %p50 = scmp.eq.s32.totalorder %s12, 1
      %p51 = scmp.ne.s32.totalorder %s46, %s48
      %p52 = scmp.eq.s32.totalorder %s12, 0
      %p53 = por %p51, %p52
      %p54 = scmp.ne.s32.totalorder %s46, %s48
      %p55 = scmp.eq.s32.totalorder %s17, 1
      %p56 = por %p54, %p55
      %p57 = scmp.ne.s32.totalorder %s48, %s49
      %p58 = scmp.eq.s32.totalorder %s17, 0
      %p59 = por %p57, %p58
      %p60 = scmp.ne.s32.totalorder %s48, %s49
      %p61 = scmp.eq.s32.totalorder %s18, 1
      %p62 = por %p60, %p61
      %p64 = scmp.ne.s32.totalorder %s49, %s63
      %p65 = scmp.eq.s32.totalorder %s18, 0
      %p66 = por %p64, %p65
      %s68 = sadd.s32 %s67, 1
      %p71 = scmp.eq.s32.totalorder %s12, 1
      %p72 = scmp.ne.s32.totalorder %s67, %s69
      %p73 = scmp.eq.s32.totalorder %s12, 0
      %p74 = por %p72, %p73
      %p75 = scmp.ne.s32.totalorder %s67, %s69
      %p76 = scmp.eq.s32.totalorder %s17, 1
      %p77 = por %p75, %p76
      %p78 = scmp.ne.s32.totalorder %s69, %s70
      %p79 = scmp.eq.s32.totalorder %s17, 0
      %p80 = por %p78, %p79
      %p81 = scmp.ne.s32.totalorder %s69, %s70
      %p82 = scmp.eq.s32.totalorder %s18, 1
      %p83 = por %p81, %p82
      %p85 = scmp.ne.s32.totalorder %s70, %s84
      %p86 = scmp.eq.s32.totalorder %s18, 0
      %p87 = por %p85, %p86
      %s88 = ssub.s32 %s12, %s19
      %p89 = scmp.eq.s32.totalorder %s88, 0
      %s91 = sadd.s32 %s90, 1
      %s92 = scalar_select %p89, %s90, %s91
      %p95 = pneg %p89
      %p96 = scmp.eq.s32.totalorder %s12, 1
      %p97 = por %p95, %p96
      %p98 = scmp.ne.s32.totalorder %s90, %s93
      %p99 = scmp.eq.s32.totalorder %s12, 0
      %p100 = por %p98, %p99
      %p101 = scmp.ne.s32.totalorder %s90, %s93
      %p102 = scmp.eq.s32.totalorder %s17, 1
      %p103 = por %p101, %p102
      %p104 = scmp.ne.s32.totalorder %s93, %s94
      %p105 = scmp.eq.s32.totalorder %s17, 0
      %p106 = por %p104, %p105
      %p107 = scmp.ne.s32.totalorder %s93, %s94
      %p108 = scmp.eq.s32.totalorder %s18, 1
      %p109 = por %p107, %p108
      %p111 = scmp.ne.s32.totalorder %s94, %s110
      %p112 = scmp.eq.s32.totalorder %s18, 0
      %p113 = por %p111, %p112
      %p114 = scmp.le.s32.totalorder 1, %s12
      %p115 = scmp.lt.s32.totalorder %s12, 3
      %p116 = pnand %p114, %p115
      %p117 = pneg %p116
      // Predicated region
      $region9: #{tpu_custom_call.1} parent=5 // pred_check
        _
      $region10: #{tpu_custom_call.1} parent=5 // pred_check_branch
        %119 = sbr.rel (%p116) target = $region12
      $region11: #{tpu_custom_call.1} parent=5 // pred_region
        %s120 = ssub.s32 %s12, 1
        // Predicated region
        $region13: #{tpu_custom_call.1} parent=11 // pred_check
          %p121 = pneg %p59
        $region14: #{tpu_custom_call.1} parent=11 // pred_check_branch
          %123 = sbr.rel (%p121) target = $region16
        $region15: #{tpu_custom_call.1} parent=11 // pred_region
          _
        $region16: #{tpu_custom_call.1} parent=11 // pred_fallthru
          _
        // Predicated region
        $region17: #{tpu_custom_call.1} parent=11 // pred_check
          %p124 = pneg %p80
        $region18: #{tpu_custom_call.1} parent=11 // pred_check_branch
          %126 = sbr.rel (%p124) target = $region20
        $region19: #{tpu_custom_call.1} parent=11 // pred_region
          _
        $region20: #{tpu_custom_call.1} parent=11 // pred_fallthru
          _
      $region12: #{tpu_custom_call.1} parent=5 // pred_fallthru
        _
      %p127 = scmp.lt.s32.totalorder %s12, 2
      // Predicated region
      $region21: #{tpu_custom_call.1} parent=5 // pred_check
        %p128 = pneg %p127
      $region22: #{tpu_custom_call.1} parent=5 // pred_check_branch
        %130 = sbr.rel (%p128) target = $region24
      $region23: #{tpu_custom_call.1} parent=5 // pred_region
        // Predicated region
        $region25: #{tpu_custom_call.1} parent=23 // pred_check
          %p131 = pneg %p32
        $region26: #{tpu_custom_call.1} parent=23 // pred_check_branch
          %133 = sbr.rel (%p131) target = $region28
        $region27: #{tpu_custom_call.1} parent=23 // pred_region
          %p134 = scmp.lt.s32.totalorder %s12, 1
          %s135 = scalar_select %p134, %s12, 1
          %s136 = smul.addr %s135, 2
          %s137 = smul.addr %s136, 8
          %s138 = scalar_lea.vmem %s0, %s137
        $region28: #{tpu_custom_call.1} parent=23 // pred_fallthru
          _
      $region24: #{tpu_custom_call.1} parent=5 // pred_fallthru
        _
      %p139 = scmp.le.s32.totalorder 1, %s12
      %p140 = scmp.lt.s32.totalorder %s12, 3
      %p141 = pnand %p139, %p140
      %p142 = pneg %p141
      // Predicated region
      $region29: #{tpu_custom_call.1} parent=5 // pred_check
        _
      $region30: #{tpu_custom_call.1} parent=5 // pred_check_branch
        %144 = sbr.rel (%p141) target = $region32
      $region31: #{tpu_custom_call.1} parent=5 // pred_region
        %s145 = ssub.s32 %s12, 1
        %p146 = scmp.lt.s32.totalorder %s17, 1
        %s147 = scalar_select %p146, %s17, 1
        %s148 = smul.addr %s147, 2
        %s149 = smul.addr %s148, 8
        %s150 = scalar_lea.vmem %s0, %s149
        %p151 = pneg %p38
        %p152 = pneg %p35
        %p153 = pneg %p59
        %p154 = pneg %p56
        %p155 = pneg %p80
        %p156 = pneg %p77
        %p157 = pneg %p106
        %p158 = pneg %p103
        %s159 = sand.u32 %s93, 1
        %s160 = scalar_lea.sflag [#allocation3], %s159
        %s161 = sand.u32 %s93, 1
        %s162 = smul.addr %s161, 4
        %s163 = scalar_lea.vmem [#allocation2], %s162
        %p164 = scmp.lt.s32.totalorder %s17, 1
        %s165 = scalar_select %p164, %s17, 1
        %s166 = smul.addr %s165, 2
        %s167 = smul.addr %s166, 8
        %s168 = scalar_lea.vmem %s0, %s167
        %v169 = vld [vmem:[%s168] sm:$0xff]
        %v170 = vld [vmem:[%s168 + $0x8] sm:$0xff]
        %v171 = vld [vmem:[%s1] sm:$0xf]
        %v172 = vld [vmem:[%s2] sm:$0xf]
        %174 = vset.pattern.permute.xlu0 0
        %175 = vperm.xlu0 %174, %v172
        %v176 = vpop.permute.xlu0 %175
        %vm178 = vcmask 31744
        %v180 = vsel %vm178, %v171, 0
        %v183 = vsel %vm178, %v169, 0
        %v186 = vsel %vm178, %v170, 0
        %188 = vmatprep.subr.mxu0 0.0
        %189 = vmatpush1.xpose.msra.mxu0 %v183
        %190 = vmatprep.subr.mxu0 0.0
        %191 = vmatpush1.xpose.msra.mxu0 %v186
        %192 = vmatprep.subr.mxu0 0.0
        %193 = vmatpush1.xpose.msra.mxu0 0.0
        %194 = vmatprep.subr.mxu0 0.0
        %195 = vmatpush1.xpose.msra.mxu0 0.0
        %196 = vmatprep.subr.mxu0 0.0
        %197 = vmatpush1.xpose.msra.mxu0 0.0
        %198 = vmatprep.subr.mxu0 0.0
        %199 = vmatpush1.xpose.msra.mxu0 0.0
        %200 = vmatprep.subr.mxu0 0.0
        %201 = vmatpush1.xpose.msra.mxu0 0.0
        %202 = vmatprep.subr.mxu0 0.0
        %203 = vmatpush1.xpose.msra.mxu0 0.0
        %204 = vmatprep.subr.mxu0 0.0
        %205 = vmatpush1.xpose.msra.mxu0 0.0
        %206 = vmatprep.subr.mxu0 0.0
        %207 = vmatpush1.xpose.msra.mxu0 0.0
        %208 = vmatprep.subr.mxu0 0.0
        %209 = vmatpush1.xpose.msra.mxu0 0.0
        %210 = vmatprep.subr.mxu0 0.0
        %211 = vmatpush1.xpose.msra.mxu0 0.0
        %212 = vmatprep.subr.mxu0 0.0
        %213 = vmatpush1.xpose.msra.mxu0 0.0
        %214 = vmatprep.subr.mxu0 0.0
        %215 = vmatpush1.xpose.msra.mxu0 0.0
        %216 = vmatprep.subr.mxu0 0.0
        %217 = vmatpush1.xpose.msra.mxu0 0.0
        %218 = vmatprep.subr.mxu0 0.0
        %219 = vmatpush1.xpose.msra.mxu0 0.0
        %220 = vmatprep.subr.mxu0 0.0
        %221 = vmatpush1.xpose.msra.mxu0 0.0
        %222 = vmatprep.subr.mxu0 0.0
        %223 = vmatpush1.xpose.msra.mxu0 0.0
        %224 = vmatprep.subr.mxu0 0.0
        %225 = vmatpush1.xpose.msra.mxu0 0.0
        %226 = vmatprep.subr.mxu0 0.0
        %227 = vmatpush1.xpose.msra.mxu0 0.0
        %228 = vmatprep.subr.mxu0 0.0
        %229 = vmatpush1.xpose.msra.mxu0 0.0
        %230 = vmatprep.subr.mxu0 0.0
        %231 = vmatpush1.xpose.msra.mxu0 0.0
        %232 = vmatprep.subr.mxu0 0.0
        %233 = vmatpush1.xpose.msra.mxu0 0.0
        %234 = vmatprep.subr.mxu0 0.0
        %235 = vmatpush1.xpose.msra.mxu0 0.0
        %236 = vmatprep.subr.mxu0 0.0
        %237 = vmatpush1.xpose.msra.mxu0 0.0
        %238 = vmatprep.subr.mxu0 0.0
        %239 = vmatpush1.xpose.msra.mxu0 0.0
        %240 = vmatprep.subr.mxu0 0.0
        %241 = vmatpush1.xpose.msra.mxu0 0.0
        %242 = vmatprep.subr.mxu0 0.0
        %243 = vmatpush1.xpose.msra.mxu0 0.0
        %244 = vmatprep.subr.mxu0 0.0
        %245 = vmatpush1.xpose.msra.mxu0 0.0
        %246 = vmatprep.subr.mxu0 0.0
        %247 = vmatpush1.xpose.msra.mxu0 0.0
        %248 = vmatprep.subr.mxu0 0.0
        %249 = vmatpush1.xpose.msra.mxu0 0.0
        %250 = vmatprep.subr.mxu0 0.0
        %251 = vmatpush1.xpose.msra.mxu0 0.0
        %252 = vmatprep.mubr.f32.mxu0 0.0
        %253 = vmatmul.mubr.f32.gmra.mrb[0].mxu0 %v180
        %v254 = vpop.f32.mrb[0].mxu0
        %v255 = vadd.f32 %v176, %v254
        %v256 = vpop.f32.mrb[0].mxu0
        %257 = vdwg.mxu0
        %v258 = vtanh.pop %v255
        %vm259 = vcmask 125952
        %260 = vst.msk [vmem:[%s163] sm:$0xf] %vm259, %v258
        %s261 = sand.u32 %s93, 1
        %s262 = scalar_lea.sflag [#allocation3], %s261
        %s263 = sand.u32 %s93, 1
        %s264 = smul.addr %s263, 4
        %s265 = scalar_lea.vmem [#allocation2], %s264
        // Predicated region
        $region33: #{tpu_custom_call.1} parent=31 // pred_check
          %p266 = pneg %p103
        $region34: #{tpu_custom_call.1} parent=31 // pred_check_branch
          %268 = sbr.rel (%p266) target = $region36
        $region35: #{tpu_custom_call.1} parent=31 // pred_region
          %s270 = ssub.s32 64, 64
          %271 = vsyncadd %s262, %s270
          %s272 = smul.addr %s17, 64
          %s273 = scalar_lea.hbm %s3, %s272
          %s275 = sshll.u32 %s265, 4
          %s276 = int_to_ptr.vmem [resolvable:$true] %s275
          %278 = dma.vmem_to_hbm [thread:$0]  %s276, 64, %s273, %s262
        $region36: #{tpu_custom_call.1} parent=31 // pred_fallthru
          _
      $region32: #{tpu_custom_call.1} parent=5 // pred_fallthru
        _
      %p279 = scmp.le.s32.totalorder 2, %s12
      // Predicated region
      $region37: #{tpu_custom_call.1} parent=5 // pred_check
        %p280 = pneg %p279
      $region38: #{tpu_custom_call.1} parent=5 // pred_check_branch
        %282 = sbr.rel (%p280) target = $region40
      $region39: #{tpu_custom_call.1} parent=5 // pred_region
        %s283 = ssub.s32 %s12, 2
        // Predicated region
        $region41: #{tpu_custom_call.1} parent=39 // pred_check
          %p284 = pneg %p109
        $region42: #{tpu_custom_call.1} parent=39 // pred_check_branch
          %286 = sbr.rel (%p284) target = $region44
        $region43: #{tpu_custom_call.1} parent=39 // pred_region
          %s287 = sand.u32 %s94, 1
          %s288 = scalar_lea.sflag [#allocation3], %s287
          %s289 = sand.u32 %s94, 1
          %s290 = smul.addr %s289, 4
          %s291 = scalar_lea.vmem [#allocation2], %s290
          %292 = dma.done %s288, 64
        $region44: #{tpu_custom_call.1} parent=39 // pred_fallthru
          _
      $region40: #{tpu_custom_call.1} parent=5 // pred_fallthru
        _
    $region6: #{tpu_custom_call.1} parent=1 // loop_footer
      %s16 = sadd.s32 1, %s12
    $region7: #{tpu_custom_call.1} parent=1 // loop_footer_branch
      %11 = sbr.rel target = $region3
    $region8: #{tpu_custom_call.1} parent=1 // loop_exit
      _
    %293 = vsyncpa [#allocation3], 1
    %s294 = scalar_lea.sflag [#allocation3], 1
    %295 = vsyncpa %s294, 1

</llo_original>
